<compile_context>
chip_gen: v7x
topology: tpu7x:2x2x1
jax: 0.10.0
libtpu: 0.0.40
codegen_flags: <defaults>
</compile_context>

<pallas_src>
import jax
import jax.numpy as jnp
from jax.experimental import pallas as pl
from jax.experimental.pallas import tpu as pltpu


def policy_kernel(x_ref, w1_ref, b1_ref, w2_ref, b2_ref, out_ref):
    tb = x_ref.shape[0]
    obs_size = x_ref.shape[1]
    hidden = w1_ref.shape[1]
    action_size = w2_ref.shape[0]
    lane_out = out_ref.shape[1]

    x = x_ref[...]                                           # (TB, obs_size)

    # ---- Layer 1: ReLU(x @ W1 + b1) as a VPU outer-product (K is tiny). ----
    h = jnp.broadcast_to(b1_ref[...], (tb, hidden))          # (TB, H)
    for k in range(obs_size):                                # static unroll
        h = h + x[:, k:k + 1] * w1_ref[k:k + 1, :]
    h = jnp.maximum(h, 0.0)                                  # ReLU on VPU

    # ---- Layer 2: mean = h @ W2^T + b2 as VPU mul + XLU lane-reduce. ----
    # Result is scattered into a lane-dense (TB, LANE_OUT) slab so the output
    # store is a full unmasked vst; padding lanes hold b2-padding zeros.
    lane = jax.lax.broadcasted_iota(jnp.int32, (tb, lane_out), 1)   # hoisted
    out = jnp.broadcast_to(b2_ref[...], (tb, lane_out))      # (TB, LANE_OUT)
    for j in range(action_size):                             # static unroll
        mj = jnp.sum(h * w2_ref[j:j + 1, :], axis=-1, keepdims=True)  # (TB, 1)
        out = out + jnp.where(lane == j, mj, 0.0)
    out_ref[...] = out.astype(out_ref.dtype)


def policy_forward(x, w1, b1, w2, b2, log_std):
    """x: (B, obs_size); w1: (obs_size, H); b1: (H,);
       w2: (action_size, H); b2: (action_size,); log_std: (action_size,).
       Returns (mean: (B, action_size), std: (action_size,))."""
    x = x.astype(jnp.float32)
    w1 = w1.astype(jnp.float32)
    w2 = w2.astype(jnp.float32)

    B, obs_size = x.shape
    action_size, hidden = w2.shape

    LANE = 128
    lane_out = ((action_size + LANE - 1) // LANE) * LANE     # lane-dense output

    # Batch tiling: sublane-aligned, capped at 512 rows per grid step.
    tile_b = min(512, max(8, ((B + 7) // 8) * 8))
    b_pad = ((B + tile_b - 1) // tile_b) * tile_b
    if b_pad != B:
        x = jnp.pad(x, ((0, b_pad - B), (0, 0)))

    b1_row = b1.reshape(1, hidden).astype(jnp.float32)
    b2_row = jnp.zeros((1, lane_out), jnp.float32).at[0, :action_size].set(
        b2.astype(jnp.float32))

    grid = (b_pad // tile_b,)
    mean_slab = pl.pallas_call(
        policy_kernel,
        out_shape=jax.ShapeDtypeStruct((b_pad, lane_out), jnp.float32),
        grid=grid,
        in_specs=[
            pl.BlockSpec((tile_b, obs_size), lambda i: (i, 0)),      # x tile
            pl.BlockSpec((obs_size, hidden), lambda i: (0, 0)),      # W1 resident
            pl.BlockSpec((1, hidden), lambda i: (0, 0)),             # b1 resident
            pl.BlockSpec((action_size, hidden), lambda i: (0, 0)),   # W2 resident
            pl.BlockSpec((1, lane_out), lambda i: (0, 0)),           # b2 resident
        ],
        out_specs=pl.BlockSpec((tile_b, lane_out), lambda i: (i, 0)),
        compiler_params=pltpu.CompilerParams(
            dimension_semantics=("parallel",)),
        cost_estimate=pl.CostEstimate(
            flops=2 * b_pad * hidden * (obs_size + action_size),
            transcendentals=0,
            bytes_accessed=4 * (b_pad * obs_size + b_pad * lane_out
                                + (obs_size + action_size + 1) * hidden
                                + lane_out),
        ),
    )(x, w1, b1_row, w2, b2_row)

    mean = mean_slab[:B, :action_size]
    # std does not depend on x -> no per-call kernel output / DMA for it.
    std = jnp.exp(log_std.astype(jnp.float32))
    return mean, std


def reference_forward(x, w1, b1, w2, b2, log_std):
    h = jnp.maximum(x @ w1 + b1, 0.0)
    mean = h @ w2.T + b2
    std = jnp.exp(log_std)
    return mean, std


if __name__ == "__main__":
    # MountainCarContinuous-v0: obs_size = 2, action_size = 1
    obs_size, action_size, hidden, batch = 2, 1, 128, 8

    key = jax.random.PRNGKey(0)
    k1, k2, k3, k4, kx = jax.random.split(key, 5)

    # Deterministic synthetic params (PyTorch Linear default-ish uniform init).
    bound1 = 1.0 / (obs_size ** 0.5)
    w1 = jax.random.uniform(k1, (obs_size, hidden), jnp.float32, -bound1, bound1)
    b1 = jax.random.uniform(k2, (hidden,), jnp.float32, -bound1, bound1)
    bound2 = 1.0 / (hidden ** 0.5)
    w2 = jax.random.uniform(k3, (action_size, hidden), jnp.float32, -bound2, bound2)
    b2 = jax.random.uniform(k4, (action_size,), jnp.float32, -bound2, bound2)
    log_std = jnp.zeros((action_size,), jnp.float32)  # nn.Parameter(torch.zeros)

    x = jax.random.normal(kx, (batch, obs_size), jnp.float32)

    mean, std = policy_forward(x, w1, b1, w2, b2, log_std)
    jax.block_until_ready((mean, std))

    mean_ref, std_ref = reference_forward(x, w1, b1, w2, b2, log_std)
    assert mean.shape == (batch, action_size)
    assert std.shape == (action_size,)
    assert jnp.allclose(mean, mean_ref, atol=1e-5, rtol=1e-5)
    assert jnp.allclose(std, std_ref, atol=1e-6, rtol=1e-6)

    print("KERNEL_OK")
</pallas_src>

<mosaic_0001>
module attributes {stable_mosaic.version = 11 : i64} {
  func.func @policy_kernel(%arg0: i32, %arg1: memref<8x2xf32, #tpu.memory_space<vmem>>, %arg2: memref<2x128xf32, #tpu.memory_space<vmem>>, %arg3: memref<1x128xf32, #tpu.memory_space<vmem>>, %arg4: memref<1x128xf32, #tpu.memory_space<vmem>>, %arg5: memref<1x128xf32, #tpu.memory_space<vmem>>, %arg6: memref<8x128xf32, #tpu.memory_space<vmem>>) attributes {dimension_semantics = [#tpu.dimension_semantics<parallel>], iteration_bounds = array<i64: 1>, scalar_prefetch = 0 : i64, scratch_operands = 0 : i64, tpu.core_type = #tpu.core_type<tc>, window_params = [{transform_indices = @transform_0, window_bounds = array<i64: 8, 2>}, {pipeline_mode = #tpu.pipeline_mode<synchronous>, transform_indices = @transform_1, window_bounds = array<i64: 2, 128>}, {pipeline_mode = #tpu.pipeline_mode<synchronous>, transform_indices = @transform_2, window_bounds = array<i64: 1, 128>}, {pipeline_mode = #tpu.pipeline_mode<synchronous>, transform_indices = @transform_3, window_bounds = array<i64: 1, 128>}, {pipeline_mode = #tpu.pipeline_mode<synchronous>, transform_indices = @transform_4, window_bounds = array<i64: 1, 128>}, {transform_indices = @transform_5, window_bounds = array<i64: 8, 128>}]} {
    %c0 = arith.constant 0 : index
    %c0_0 = arith.constant 0 : index
    %0 = vector.load %arg1[%c0, %c0_0] : memref<8x2xf32, #tpu.memory_space<vmem>>, vector<8x2xf32>
    %c0_1 = arith.constant 0 : index
    %c0_2 = arith.constant 0 : index
    %1 = vector.load %arg3[%c0_1, %c0_2] : memref<1x128xf32, #tpu.memory_space<vmem>>, vector<1x128xf32>
    %2 = vector.shape_cast %1 : vector<1x128xf32> to vector<1x128xf32>
    %3 = vector.broadcast %2 : vector<1x128xf32> to vector<8x128xf32>
    %4 = vector.extract_strided_slice %0 {offsets = [0, 0], sizes = [8, 1], strides = [1, 1]} : vector<8x2xf32> to vector<8x1xf32>
    %c0_3 = arith.constant 0 : index
    %c0_4 = arith.constant 0 : index
    %5 = vector.load %arg2[%c0_3, %c0_4] : memref<2x128xf32, #tpu.memory_space<vmem>>, vector<1x128xf32>
    %6 = vector.broadcast %4 : vector<8x1xf32> to vector<8x128xf32>
    %7 = vector.broadcast %5 : vector<1x128xf32> to vector<8x128xf32>
    %8 = arith.mulf %6, %7 : vector<8x128xf32>
    %9 = arith.addf %3, %8 : vector<8x128xf32>
    %10 = vector.extract_strided_slice %0 {offsets = [0, 1], sizes = [8, 1], strides = [1, 1]} : vector<8x2xf32> to vector<8x1xf32>
    %c1 = arith.constant 1 : index
    %c0_5 = arith.constant 0 : index
    %11 = vector.load %arg2[%c1, %c0_5] : memref<2x128xf32, #tpu.memory_space<vmem>>, vector<1x128xf32>
    %12 = vector.broadcast %10 : vector<8x1xf32> to vector<8x128xf32>
    %13 = vector.broadcast %11 : vector<1x128xf32> to vector<8x128xf32>
    %14 = arith.mulf %12, %13 : vector<8x128xf32>
    %15 = arith.addf %9, %14 : vector<8x128xf32>
    %cst = arith.constant 0.000000e+00 : f32
    %16 = vector.broadcast %cst : f32 to vector<8x128xf32>
    %17 = arith.maximumf %15, %16 : vector<8x128xf32>
    %18 = tpu.iota {dimensions = array<i32: 1>} : vector<8x128xi32>
    %c0_6 = arith.constant 0 : index
    %c0_7 = arith.constant 0 : index
    %19 = vector.load %arg5[%c0_6, %c0_7] : memref<1x128xf32, #tpu.memory_space<vmem>>, vector<1x128xf32>
    %20 = vector.shape_cast %19 : vector<1x128xf32> to vector<1x128xf32>
    %21 = vector.broadcast %20 : vector<1x128xf32> to vector<8x128xf32>
    %c0_8 = arith.constant 0 : index
    %c0_9 = arith.constant 0 : index
    %22 = vector.load %arg4[%c0_8, %c0_9] : memref<1x128xf32, #tpu.memory_space<vmem>>, vector<1x128xf32>
    %23 = vector.broadcast %22 : vector<1x128xf32> to vector<8x128xf32>
    %24 = arith.mulf %17, %23 : vector<8x128xf32>
    %cst_10 = arith.constant dense<0.000000e+00> : vector<8xf32>
    %25 = vector.multi_reduction <add>, %24, %cst_10 [1] : vector<8x128xf32> to vector<8xf32>
    %26 = vector.shape_cast %25 : vector<8xf32> to vector<8x1xf32>
    %c0_i32 = arith.constant 0 : i32
    %27 = vector.broadcast %c0_i32 : i32 to vector<8x128xi32>
    %28 = arith.cmpi eq, %18, %27 : vector<8x128xi32>
    %cst_11 = arith.constant 0.000000e+00 : f32
    %29 = vector.shape_cast %26 : vector<8x1xf32> to vector<8x1xf32>
    %30 = vector.broadcast %29 : vector<8x1xf32> to vector<8x128xf32>
    %31 = vector.broadcast %cst_11 : f32 to vector<8x128xf32>
    %32 = arith.select %28, %30, %31 : vector<8x128xi1>, vector<8x128xf32>
    %33 = arith.addf %21, %32 : vector<8x128xf32>
    %c0_12 = arith.constant 0 : index
    %c0_13 = arith.constant 0 : index
    %34 = vector.load %arg6[%c0_12, %c0_13] : memref<8x128xf32, #tpu.memory_space<vmem>>, vector<8x128xf32>
    tpu.vector_store %arg6[%c0_12, %c0_13], %33 {strides = array<i32>} : memref<8x128xf32, #tpu.memory_space<vmem>>, vector<8x128xf32>,
    return
  }
  func.func @transform_0(%arg0: i32) -> (i32, i32) {
    %c0_i32 = arith.constant 0 : i32
    %c0_i32_0 = arith.constant 0 : i32
    return %arg0, %c0_i32 : i32, i32
  }
  func.func @transform_1(%arg0: i32) -> (i32, i32) {
    %c0_i32 = arith.constant 0 : i32
    %c0_i32_0 = arith.constant 0 : i32
    %c0_i32_1 = arith.constant 0 : i32
    return %c0_i32, %c0_i32_0 : i32, i32
  }
  func.func @transform_2(%arg0: i32) -> (i32, i32) {
    %c0_i32 = arith.constant 0 : i32
    %c0_i32_0 = arith.constant 0 : i32
    %c0_i32_1 = arith.constant 0 : i32
    return %c0_i32, %c0_i32_0 : i32, i32
  }
  func.func @transform_3(%arg0: i32) -> (i32, i32) {
    %c0_i32 = arith.constant 0 : i32
    %c0_i32_0 = arith.constant 0 : i32
    %c0_i32_1 = arith.constant 0 : i32
    return %c0_i32, %c0_i32_0 : i32, i32
  }
  func.func @transform_4(%arg0: i32) -> (i32, i32) {
    %c0_i32 = arith.constant 0 : i32
    %c0_i32_0 = arith.constant 0 : i32
    %c0_i32_1 = arith.constant 0 : i32
    return %c0_i32, %c0_i32_0 : i32, i32
  }
  func.func @transform_5(%arg0: i32) -> (i32, i32) {
    %c0_i32 = arith.constant 0 : i32
    %c0_i32_0 = arith.constant 0 : i32
    return %arg0, %c0_i32 : i32, i32
  }
}

</mosaic_0001>

<llo_original>
// kernel: tpu_custom_call.1
$region0: #{tpu_custom_call.1}
  #allocation0 [shape = 'u32[]', space=smem, size = 0x4, offset = 0x4, fixed_abs, tag = 'smem constant byte address 0x4 - core index']
  #allocation1 [shape = 'u32[144,128]{1,0:T(1,128)}', space=vmem, size = 0x12000, scoped, tag = 'internal scratch']
  %s0 = inlined_call_operand.vmem [shape: f32[8,2], index: 0, kind: input, shape index: {}]
  %s1 = inlined_call_operand.vmem [shape: f32[2,128], index: 1, kind: input, shape index: {}]
  %s2 = inlined_call_operand.vmem [shape: f32[1,128], index: 2, kind: input, shape index: {}]
  %s3 = inlined_call_operand.vmem [shape: f32[1,128], index: 3, kind: input, shape index: {}]
  %s4 = inlined_call_operand.vmem [shape: f32[1,128], index: 4, kind: input, shape index: {}]
  %s5 = inlined_call_operand.hbm [shape: f32[8,128], index: 5, kind: output, shape index: {}]
  %s6 = sld [smem:[#allocation0]]
  $region30: #{tpu_custom_call.1} parent=0
    _
  %s8 = ssub.s32 1, %s6
  %s9 = scalar_select 0, %s8, %s6
  $region1: #{tpu_custom_call.1} parent=0
    #allocation2 [shape = 'u8[4096]{0}', space=vmem, size = 0x1000, scoped, tag = 'output window, operand 0, single buffered']
    #allocation3 [shape = 's32[1]{0}', space=sflag, size = 0x4, scoped, tag = 'scoped memory for tpu_custom_call.1']
    %10 = vsyncpa [#allocation3], 0
    // Predicated region
    $region2: #{tpu_custom_call.1} parent=1 // pred_check
      _
    $region3: #{tpu_custom_call.1} parent=1 // pred_check_branch
      %12 = sbr.rel (0) target = $region5
    $region4: #{tpu_custom_call.1} parent=1 // pred_region
      _
    $region5: #{tpu_custom_call.1} parent=1 // pred_fallthru
      _
    // Predicated region
    $region6: #{tpu_custom_call.1} parent=1 // pred_check
      _
    $region7: #{tpu_custom_call.1} parent=1 // pred_check_branch
      %14 = sbr.rel (0) target = $region9
    $region8: #{tpu_custom_call.1} parent=1 // pred_region
      _
    $region9: #{tpu_custom_call.1} parent=1 // pred_fallthru
      _
    // Predicated region
    $region10: #{tpu_custom_call.1} parent=1 // pred_check
      _
    $region11: #{tpu_custom_call.1} parent=1 // pred_check_branch
      %16 = sbr.rel (0) target = $region13
    $region12: #{tpu_custom_call.1} parent=1 // pred_region
      _
    $region13: #{tpu_custom_call.1} parent=1 // pred_fallthru
      _
    // Predicated region
    $region14: #{tpu_custom_call.1} parent=1 // pred_check
      _
    $region15: #{tpu_custom_call.1} parent=1 // pred_check_branch
      %18 = sbr.rel (0) target = $region17
    $region16: #{tpu_custom_call.1} parent=1 // pred_region
      _
    $region17: #{tpu_custom_call.1} parent=1 // pred_fallthru
      _
    // Predicated region
    $region18: #{tpu_custom_call.1} parent=1 // pred_check
      _
    $region19: #{tpu_custom_call.1} parent=1 // pred_check_branch
      %20 = sbr.rel (0) target = $region21
    $region20: #{tpu_custom_call.1} parent=1 // pred_region
      _
    $region21: #{tpu_custom_call.1} parent=1 // pred_fallthru
      _
    %v21 = vld [vmem:[%s0] sm:$0xff]
    %v22 = vld [vmem:[%s2] sm:$0x1]
    %v24 = vlaneseq
    %v25 = vshrl.u32 %v24, 7
    %v26 = vsub.s32 0, %v25
    %v27 = vrot.slane %v22, %v26
    %v29 = vld [vmem:[%s1] sm:$0x1]
    %31 = vset.pattern.permute.xlu0 0
    %32 = vperm.xlu0 %31, %v21
    %v33 = vpop.permute.xlu0 %32
    %v35 = vlaneseq
    %v36 = vshrl.u32 %v35, 7
    %v37 = vsub.s32 0, %v36
    %v38 = vrot.slane %v29, %v37
    %v39 = vmul.f32 %v33, %v38
    %v40 = vadd.f32 %v27, %v39
    %v41 = vld [vmem:[%s1 + $0x1] sm:$0x1]
    %42 = vset.pattern.permute.xlu0 1
    %43 = vperm.xlu0 %42, %v21
    %v44 = vpop.permute.xlu0 %43
    %v46 = vlaneseq
    %v47 = vshrl.u32 %v46, 7
    %v48 = vsub.s32 0, %v47
    %v49 = vrot.slane %v41, %v48
    %v50 = vmul.f32 %v44, %v49
    %v51 = vadd.f32 %v40, %v50
    %v52 = vmax.f32 %v51, 0.0
    %v53 = vlaneseq
    %v54 = vand.u32 %v53, 127
    %v55 = vld [vmem:[%s4] sm:$0x1]
    %v57 = vlaneseq
    %v58 = vshrl.u32 %v57, 7
    %v59 = vsub.s32 0, %v58
    %v60 = vrot.slane %v55, %v59
    %v62 = vld [vmem:[%s3] sm:$0x1]
    %v64 = vlaneseq
    %v65 = vshrl.u32 %v64, 7
    %v66 = vsub.s32 0, %v65
    %v67 = vrot.slane %v62, %v66
    %v69 = vmul.f32 %v52, %v67
    %70 = vadd.xlane.f32.xlu0 %v69
    %v71 = vpop.xlane.xlu0 %70
    %vm72 = vcmp.eq.s32.totalorder %v54, 0
    %v73 = vsel %vm72, %v71, 0.0
    %v74 = vadd.f32 %v60, %v73
    %75 = vst [vmem:[#allocation2] sm:$0xff] %v74
    // Predicated region
    $region22: #{tpu_custom_call.1} parent=1 // pred_check
      _
    $region23: #{tpu_custom_call.1} parent=1 // pred_check_branch
      %77 = sbr.rel (0) target = $region25
    $region24: #{tpu_custom_call.1} parent=1 // pred_region
      %s79 = ssub.s32 128, 128
      %80 = vsyncadd [#allocation3], %s79
      %s82 = sshll.u32 [#allocation2], 4
      %s83 = int_to_ptr.vmem [resolvable:$true] %s82
      %85 = dma.vmem_to_hbm [thread:$0]  %s83, 128, %s5, [#allocation3]
    $region25: #{tpu_custom_call.1} parent=1 // pred_fallthru
      _
    // Predicated region
    $region26: #{tpu_custom_call.1} parent=1 // pred_check
      _
    $region27: #{tpu_custom_call.1} parent=1 // pred_check_branch
      %87 = sbr.rel (0) target = $region29
    $region28: #{tpu_custom_call.1} parent=1 // pred_region
      %88 = dma.done [#allocation3], 128
    $region29: #{tpu_custom_call.1} parent=1 // pred_fallthru
      _
    %89 = vsyncpa [#allocation3], 1

</llo_original>
